<compile_context>
chip_gen: v5e
topology: v5e:2x2
jax: 0.10.0
libtpu: 0.0.40
codegen_flags: <defaults>
</compile_context>

<pallas_src>
import jax
import jax.numpy as jnp
import numpy as np
from jax.experimental import pallas as pl
from jax.experimental.pallas import tpu as pltpu


def _m_forward_kernel(xy_ref, w1_ref, b1_ref, w2_ref, b2_ref, o_ref, x1_ref):
    # Stage 1 (merged): x1 = [x|y] @ W1 + (b1a + b1b)        -> (tb, H) f32
    x1_ref[...] = (
        jnp.dot(xy_ref[...], w1_ref[...], preferred_element_type=jnp.float32)
        + b1_ref[...]
    )
    # Stage 2 (merged): x2 = x1 @ (W2a + W2b) + (b2a + b2b)  -> (tb, Dout) f32
    x2 = (
        jnp.dot(x1_ref[...], w2_ref[...], preferred_element_type=jnp.float32)
        + b2_ref[...]
    )
    o_ref[...] = x2.astype(o_ref.dtype)


def m_forward(x, y, w1a, b1a, w1b, b1b, w2a, b2a, w2b, b2b, *, tb=None):
    """x, y: (B, Din).  Weights in PyTorch (out, in) layout, biases (out,).

    Returns x2: (B, Dout) with M.forward semantics.
    """
    B, Din = x.shape
    H = w1a.shape[0]      # 128
    Dout = w2a.shape[0]   # 256

    # ---- wrapper-side algebraic merges (tiny, hoisted/const-folded under jit) ----
    xy = jnp.concatenate([x, y], axis=1)                       # (B, 2*Din)
    w1 = jnp.concatenate([w1a, w1b], axis=1).T                 # (2*Din, H), (in, out)
    b1 = (b1a + b1b).reshape(1, H)
    w2 = (w2a + w2b).T                                         # (H, Dout), (in, out)
    b2 = (b2a + b2b).reshape(1, Dout)

    K1 = 2 * Din
    if tb is None:
        tb = B if B <= 512 else 512                            # big row tiles; tiny VMEM need
    grid = (pl.cdiv(B, tb),)

    row = lambda i: (i, 0)      # per-batch-tile blocks
    whole = lambda i: (0, 0)    # resident weights / biases

    flops = 2 * B * K1 * H + 2 * B * H * Dout
    bytes_accessed = 4 * (xy.size + w1.size + b1.size + w2.size + b2.size + B * Dout)

    return pl.pallas_call(
        _m_forward_kernel,
        out_shape=jax.ShapeDtypeStruct((B, Dout), x.dtype),
        grid_spec=pltpu.PrefetchScalarGridSpec(
            num_scalar_prefetch=0,
            grid=grid,
            in_specs=[
                pl.BlockSpec((tb, K1), row),       # [x|y] row tile
                pl.BlockSpec((K1, H), whole),      # W1   (in, out), resident
                pl.BlockSpec((1, H), whole),       # b1
                pl.BlockSpec((H, Dout), whole),    # W2   (in, out), resident
                pl.BlockSpec((1, Dout), whole),    # b2
            ],
            out_specs=pl.BlockSpec((tb, Dout), row),
            scratch_shapes=[pltpu.VMEM((tb, H), jnp.float32)],  # x1 staging
        ),
        compiler_params=pltpu.CompilerParams(
            # Row tiles are independent; near no-op at grid=(1,), harmless otherwise.
            dimension_semantics=("parallel",)),
        cost_estimate=pl.CostEstimate(
            flops=flops, transcendentals=0, bytes_accessed=bytes_accessed),
    )(xy, w1, b1, w2, b2)


if __name__ == "__main__":
    key = jax.random.PRNGKey(0)
    ks = jax.random.split(key, 10)

    B, Din, H, Dout = 8, 64, 128, 256

    def lin_init(kw, kb, out_f, in_f):
        # PyTorch-default-like uniform(+-1/sqrt(fan_in)) init, (out, in) layout.
        bound = 1.0 / np.sqrt(in_f)
        w = jax.random.uniform(kw, (out_f, in_f), jnp.float32, -bound, bound)
        b = jax.random.uniform(kb, (out_f,), jnp.float32, -bound, bound)
        return w, b

    w1a, b1a = lin_init(ks[0], ks[1], H, Din)      # two_linear1.linear1
    w1b, b1b = lin_init(ks[2], ks[3], H, Din)      # two_linear1.linear2
    w2a, b2a = lin_init(ks[4], ks[5], Dout, H)     # two_linear2.linear1
    w2b, b2b = lin_init(ks[6], ks[7], Dout, H)     # two_linear2.linear2
    x = jax.random.normal(ks[8], (B, Din), jnp.float32)
    y = jax.random.normal(ks[9], (B, Din), jnp.float32)

    fwd = jax.jit(m_forward)
    out = fwd(x, y, w1a, b1a, w1b, b1b, w2a, b2a, w2b, b2b)
    jax.block_until_ready(out)

    # pure-JAX reference (M.forward semantics, un-merged)
    hp = jax.lax.Precision.HIGHEST
    x1_ref = (jnp.dot(x, w1a.T, precision=hp) + b1a
              + jnp.dot(y, w1b.T, precision=hp) + b1b)
    x2_ref = (jnp.dot(x1_ref, w2a.T, precision=hp) + b2a
              + jnp.dot(x1_ref, w2b.T, precision=hp) + b2b)

    np.testing.assert_allclose(np.asarray(out), np.asarray(x2_ref), rtol=2e-2, atol=2e-2)
    print("KERNEL_OK")
</pallas_src>

<mosaic_0001>
module attributes {stable_mosaic.version = 11 : i64} {
  func.func @_m_forward_kernel(%arg0: i32, %arg1: memref<8x128xf32, #tpu.memory_space<vmem>>, %arg2: memref<128x128xf32, #tpu.memory_space<vmem>>, %arg3: memref<1x128xf32, #tpu.memory_space<vmem>>, %arg4: memref<128x256xf32, #tpu.memory_space<vmem>>, %arg5: memref<1x256xf32, #tpu.memory_space<vmem>>, %arg6: memref<8x256xf32, #tpu.memory_space<vmem>>, %arg7: memref<8x128xf32, #tpu.memory_space<vmem>>) attributes {dimension_semantics = [#tpu.dimension_semantics<parallel>], iteration_bounds = array<i64: 1>, scalar_prefetch = 0 : i64, scratch_operands = 1 : i64, tpu.core_type = #tpu.core_type<tc>, window_params = [{transform_indices = @transform_0, window_bounds = array<i64: 8, 128>}, {pipeline_mode = #tpu.pipeline_mode<synchronous>, transform_indices = @transform_1, window_bounds = array<i64: 128, 128>}, {pipeline_mode = #tpu.pipeline_mode<synchronous>, transform_indices = @transform_2, window_bounds = array<i64: 1, 128>}, {pipeline_mode = #tpu.pipeline_mode<synchronous>, transform_indices = @transform_3, window_bounds = array<i64: 128, 256>}, {pipeline_mode = #tpu.pipeline_mode<synchronous>, transform_indices = @transform_4, window_bounds = array<i64: 1, 256>}, {transform_indices = @transform_5, window_bounds = array<i64: 8, 256>}]} {
    %c0 = arith.constant 0 : index
    %c0_0 = arith.constant 0 : index
    %0 = vector.load %arg1[%c0, %c0_0] : memref<8x128xf32, #tpu.memory_space<vmem>>, vector<8x128xf32>
    %c0_1 = arith.constant 0 : index
    %c0_2 = arith.constant 0 : index
    %1 = vector.load %arg2[%c0_1, %c0_2] : memref<128x128xf32, #tpu.memory_space<vmem>>, vector<128x128xf32>
    %cst = arith.constant dense<0.000000e+00> : vector<8x128xf32>
    %2 = tpu.matmul %0, %1, %cst {dimension_numbers = #tpu.dot_dimension_numbers<[1], [0], [0], [1], [0, 0, 1, 1], [], []>} : vector<8x128xf32>, vector<128x128xf32>, vector<8x128xf32> -> vector<8x128xf32>
    %c0_3 = arith.constant 0 : index
    %c0_4 = arith.constant 0 : index
    %3 = vector.load %arg3[%c0_3, %c0_4] : memref<1x128xf32, #tpu.memory_space<vmem>>, vector<1x128xf32>
    %4 = vector.broadcast %3 : vector<1x128xf32> to vector<8x128xf32>
    %5 = arith.addf %2, %4 : vector<8x128xf32>
    %c0_5 = arith.constant 0 : index
    %c0_6 = arith.constant 0 : index
    %6 = vector.load %arg7[%c0_5, %c0_6] : memref<8x128xf32, #tpu.memory_space<vmem>>, vector<8x128xf32>
    tpu.vector_store %arg7[%c0_5, %c0_6], %5 {strides = array<i32>} : memref<8x128xf32, #tpu.memory_space<vmem>>, vector<8x128xf32>,
    %c0_7 = arith.constant 0 : index
    %c0_8 = arith.constant 0 : index
    %7 = vector.load %arg7[%c0_7, %c0_8] : memref<8x128xf32, #tpu.memory_space<vmem>>, vector<8x128xf32>
    %c0_9 = arith.constant 0 : index
    %c0_10 = arith.constant 0 : index
    %8 = vector.load %arg4[%c0_9, %c0_10] : memref<128x256xf32, #tpu.memory_space<vmem>>, vector<128x256xf32>
    %cst_11 = arith.constant dense<0.000000e+00> : vector<8x256xf32>
    %9 = tpu.matmul %7, %8, %cst_11 {dimension_numbers = #tpu.dot_dimension_numbers<[1], [0], [0], [1], [0, 0, 1, 1], [], []>} : vector<8x128xf32>, vector<128x256xf32>, vector<8x256xf32> -> vector<8x256xf32>
    %c0_12 = arith.constant 0 : index
    %c0_13 = arith.constant 0 : index
    %10 = vector.load %arg5[%c0_12, %c0_13] : memref<1x256xf32, #tpu.memory_space<vmem>>, vector<1x256xf32>
    %11 = vector.broadcast %10 : vector<1x256xf32> to vector<8x256xf32>
    %12 = arith.addf %9, %11 : vector<8x256xf32>
    %c0_14 = arith.constant 0 : index
    %c0_15 = arith.constant 0 : index
    %13 = vector.load %arg6[%c0_14, %c0_15] : memref<8x256xf32, #tpu.memory_space<vmem>>, vector<8x256xf32>
    tpu.vector_store %arg6[%c0_14, %c0_15], %12 {strides = array<i32>} : memref<8x256xf32, #tpu.memory_space<vmem>>, vector<8x256xf32>,
    return
  }
  func.func @transform_0(%arg0: i32) -> (i32, i32) {
    %c0_i32 = arith.constant 0 : i32
    %c0_i32_0 = arith.constant 0 : i32
    return %arg0, %c0_i32 : i32, i32
  }
  func.func @transform_1(%arg0: i32) -> (i32, i32) {
    %c0_i32 = arith.constant 0 : i32
    %c0_i32_0 = arith.constant 0 : i32
    %c0_i32_1 = arith.constant 0 : i32
    return %c0_i32, %c0_i32_0 : i32, i32
  }
  func.func @transform_2(%arg0: i32) -> (i32, i32) {
    %c0_i32 = arith.constant 0 : i32
    %c0_i32_0 = arith.constant 0 : i32
    %c0_i32_1 = arith.constant 0 : i32
    return %c0_i32, %c0_i32_0 : i32, i32
  }
  func.func @transform_3(%arg0: i32) -> (i32, i32) {
    %c0_i32 = arith.constant 0 : i32
    %c0_i32_0 = arith.constant 0 : i32
    %c0_i32_1 = arith.constant 0 : i32
    return %c0_i32, %c0_i32_0 : i32, i32
  }
  func.func @transform_4(%arg0: i32) -> (i32, i32) {
    %c0_i32 = arith.constant 0 : i32
    %c0_i32_0 = arith.constant 0 : i32
    %c0_i32_1 = arith.constant 0 : i32
    return %c0_i32, %c0_i32_0 : i32, i32
  }
  func.func @transform_5(%arg0: i32) -> (i32, i32) {
    %c0_i32 = arith.constant 0 : i32
    %c0_i32_0 = arith.constant 0 : i32
    return %arg0, %c0_i32 : i32, i32
  }
}

</mosaic_0001>

<llo_original>
// kernel: m_forward.1
$region0: #{m_forward.1}
  #allocation0 [shape = 'u32[]', space=smem, size = 0x4, offset = 0x4, fixed_abs, tag = 'smem constant byte address 0x4 - core index']
  #allocation1 [shape = 'u32[72,128]{1,0:T(1,128)}', space=vmem, size = 0x9000, scoped, tag = 'internal scratch']
  #allocation2 [shape = 'f32[8,128]{1,0:T(8,128)}', space=vmem, size = 0x1000, scoped, tag = 'scratch operand']
  %s0 = inlined_call_operand.vmem [shape: f32[8,128], index: 0, kind: input, shape index: {}]
  %s1 = inlined_call_operand.vmem [shape: f32[128,128], index: 1, kind: input, shape index: {}]
  %s2 = inlined_call_operand.vmem [shape: f32[1,128], index: 2, kind: input, shape index: {}]
  %s3 = inlined_call_operand.vmem [shape: f32[128,256], index: 3, kind: input, shape index: {}]
  %s4 = inlined_call_operand.vmem [shape: f32[1,256], index: 4, kind: input, shape index: {}]
  %s5 = inlined_call_operand.hbm [shape: f32[8,256], index: 5, kind: output, shape index: {}]
  %s6 = sld [smem:[#allocation0]]
  $region30: #{m_forward.1} parent=0
    _
  %s8 = ssub.s32 1, %s6
  %s9 = scalar_select 0, %s8, %s6
  $region1: #{m_forward.1} parent=0
    #allocation3 [shape = 'u8[8192]{0}', space=vmem, size = 0x2000, scoped, tag = 'output window, operand 0, single buffered']
    #allocation4 [shape = 's32[1]{0}', space=sflag, size = 0x4, scoped, tag = 'scoped memory for m_forward.1']
    %10 = vsyncpa [#allocation4], 0
    // Predicated region
    $region2: #{m_forward.1} parent=1 // pred_check
      _
    $region3: #{m_forward.1} parent=1 // pred_check_branch
      %12 = sbr.rel (0) target = $region5
    $region4: #{m_forward.1} parent=1 // pred_region
      _
    $region5: #{m_forward.1} parent=1 // pred_fallthru
      _
    // Predicated region
    $region6: #{m_forward.1} parent=1 // pred_check
      _
    $region7: #{m_forward.1} parent=1 // pred_check_branch
      %14 = sbr.rel (0) target = $region9
    $region8: #{m_forward.1} parent=1 // pred_region
      _
    $region9: #{m_forward.1} parent=1 // pred_fallthru
      _
    // Predicated region
    $region10: #{m_forward.1} parent=1 // pred_check
      _
    $region11: #{m_forward.1} parent=1 // pred_check_branch
      %16 = sbr.rel (0) target = $region13
    $region12: #{m_forward.1} parent=1 // pred_region
      _
    $region13: #{m_forward.1} parent=1 // pred_fallthru
      _
    // Predicated region
    $region14: #{m_forward.1} parent=1 // pred_check
      _
    $region15: #{m_forward.1} parent=1 // pred_check_branch
      %18 = sbr.rel (0) target = $region17
    $region16: #{m_forward.1} parent=1 // pred_region
      _
    $region17: #{m_forward.1} parent=1 // pred_fallthru
      _
    // Predicated region
    $region18: #{m_forward.1} parent=1 // pred_check
      _
    $region19: #{m_forward.1} parent=1 // pred_check_branch
      %20 = sbr.rel (0) target = $region21
    $region20: #{m_forward.1} parent=1 // pred_region
      _
    $region21: #{m_forward.1} parent=1 // pred_fallthru
      _
    %v21 = vld [vmem:[%s0] sm:$0xff]
    %v22 = vld [vmem:[%s1] sm:$0xff]
    %v23 = vld [vmem:[%s1 + $0x8] sm:$0xff]
    %v24 = vld [vmem:[%s1 + $0x10] sm:$0xff]
    %v25 = vld [vmem:[%s1 + $0x18] sm:$0xff]
    %v26 = vld [vmem:[%s1 + $0x20] sm:$0xff]
    %v27 = vld [vmem:[%s1 + $0x28] sm:$0xff]
    %v28 = vld [vmem:[%s1 + $0x30] sm:$0xff]
    %v29 = vld [vmem:[%s1 + $0x38] sm:$0xff]
    %v30 = vld [vmem:[%s1 + $0x40] sm:$0xff]
    %v31 = vld [vmem:[%s1 + $0x48] sm:$0xff]
    %v32 = vld [vmem:[%s1 + $0x50] sm:$0xff]
    %v33 = vld [vmem:[%s1 + $0x58] sm:$0xff]
    %v34 = vld [vmem:[%s1 + $0x60] sm:$0xff]
    %v35 = vld [vmem:[%s1 + $0x68] sm:$0xff]
    %v36 = vld [vmem:[%s1 + $0x70] sm:$0xff]
    %v37 = vld [vmem:[%s1 + $0x78] sm:$0xff]
    %v38 = vld [vmem:[%s2] sm:$0x1]
    %v40 = vperm.slane %v38, 0
    %42 = vmatpush.msra.mxu0 %v37
    %43 = vmatpush.msra.mxu0 %v36
    %44 = vmatpush.msra.mxu0 %v35
    %45 = vmatpush.msra.mxu0 %v34
    %46 = vmatpush.msra.mxu0 %v33
    %47 = vmatpush.msra.mxu0 %v32
    %48 = vmatpush.msra.mxu0 %v31
    %49 = vmatpush.msra.mxu0 %v30
    %50 = vmatpush.msra.mxu0 %v29
    %51 = vmatpush.msra.mxu0 %v28
    %52 = vmatpush.msra.mxu0 %v27
    %53 = vmatpush.msra.mxu0 %v26
    %54 = vmatpush.msra.mxu0 %v25
    %55 = vmatpush.msra.mxu0 %v24
    %56 = vmatpush.msra.mxu0 %v23
    %57 = vmatpush.msra.mxu0 %v22
    %58 = vmatmul.f32.gmra.mxu0 %v21
    %v59 = vpop.f32.mrf.mxu0
    %v60 = vadd.f32 %v40, %v59
    %61 = vdwg.mxu0
    %62 = vst [vmem:[#allocation2] sm:$0xff] %v60
    %v63 = vld [vmem:[#allocation2] sm:$0xff]
    %v64 = vld [vmem:[%s3] sm:$0xff]
    %v65 = vld [vmem:[%s3 + $0x8] sm:$0xff]
    %v66 = vld [vmem:[%s3 + $0x10] sm:$0xff]
    %v67 = vld [vmem:[%s3 + $0x18] sm:$0xff]
    %v68 = vld [vmem:[%s3 + $0x20] sm:$0xff]
    %v69 = vld [vmem:[%s3 + $0x28] sm:$0xff]
    %v70 = vld [vmem:[%s3 + $0x30] sm:$0xff]
    %v71 = vld [vmem:[%s3 + $0x38] sm:$0xff]
    %v72 = vld [vmem:[%s3 + $0x40] sm:$0xff]
    %v73 = vld [vmem:[%s3 + $0x48] sm:$0xff]
    %v74 = vld [vmem:[%s3 + $0x50] sm:$0xff]
    %v75 = vld [vmem:[%s3 + $0x58] sm:$0xff]
    %v76 = vld [vmem:[%s3 + $0x60] sm:$0xff]
    %v77 = vld [vmem:[%s3 + $0x68] sm:$0xff]
    %v78 = vld [vmem:[%s3 + $0x70] sm:$0xff]
    %v79 = vld [vmem:[%s3 + $0x78] sm:$0xff]
    %v80 = vld [vmem:[%s3 + $0x80] sm:$0xff]
    %v81 = vld [vmem:[%s3 + $0x88] sm:$0xff]
    %v82 = vld [vmem:[%s3 + $0x90] sm:$0xff]
    %v83 = vld [vmem:[%s3 + $0x98] sm:$0xff]
    %v84 = vld [vmem:[%s3 + $0xa0] sm:$0xff]
    %v85 = vld [vmem:[%s3 + $0xa8] sm:$0xff]
    %v86 = vld [vmem:[%s3 + $0xb0] sm:$0xff]
    %v87 = vld [vmem:[%s3 + $0xb8] sm:$0xff]
    %v88 = vld [vmem:[%s3 + $0xc0] sm:$0xff]
    %v89 = vld [vmem:[%s3 + $0xc8] sm:$0xff]
    %v90 = vld [vmem:[%s3 + $0xd0] sm:$0xff]
    %v91 = vld [vmem:[%s3 + $0xd8] sm:$0xff]
    %v92 = vld [vmem:[%s3 + $0xe0] sm:$0xff]
    %v93 = vld [vmem:[%s3 + $0xe8] sm:$0xff]
    %v94 = vld [vmem:[%s3 + $0xf0] sm:$0xff]
    %v95 = vld [vmem:[%s3 + $0xf8] sm:$0xff]
    %v96 = vld [vmem:[%s4] sm:$0x3]
    %v98 = vperm.slane %v96, 0
    %v99 = vperm.slane %v96, 1
    %102 = vmatpush.msra.mxu0 %v94
    %103 = vmatpush.msra.mxu0 %v92
    %104 = vmatpush.msra.mxu0 %v90
    %105 = vmatpush.msra.mxu0 %v88
    %106 = vmatpush.msra.mxu0 %v86
    %107 = vmatpush.msra.mxu0 %v84
    %108 = vmatpush.msra.mxu0 %v82
    %109 = vmatpush.msra.mxu0 %v80
    %110 = vmatpush.msra.mxu0 %v78
    %111 = vmatpush.msra.mxu0 %v76
    %112 = vmatpush.msra.mxu0 %v74
    %113 = vmatpush.msra.mxu0 %v72
    %114 = vmatpush.msra.mxu0 %v70
    %115 = vmatpush.msra.mxu0 %v68
    %116 = vmatpush.msra.mxu0 %v66
    %117 = vmatpush.msra.mxu0 %v64
    %118 = vmatmul.f32.gmra.mxu0 %v63
    %v119 = vpop.f32.mrf.mxu0
    %v120 = vadd.f32 %v98, %v119
    %121 = vdwg.mxu0
    %122 = vmatpush.msra.mxu0 %v95
    %123 = vmatpush.msra.mxu0 %v93
    %124 = vmatpush.msra.mxu0 %v91
    %125 = vmatpush.msra.mxu0 %v89
    %126 = vmatpush.msra.mxu0 %v87
    %127 = vmatpush.msra.mxu0 %v85
    %128 = vmatpush.msra.mxu0 %v83
    %129 = vmatpush.msra.mxu0 %v81
    %130 = vmatpush.msra.mxu0 %v79
    %131 = vmatpush.msra.mxu0 %v77
    %132 = vmatpush.msra.mxu0 %v75
    %133 = vmatpush.msra.mxu0 %v73
    %134 = vmatpush.msra.mxu0 %v71
    %135 = vmatpush.msra.mxu0 %v69
    %136 = vmatpush.msra.mxu0 %v67
    %137 = vmatpush.msra.mxu0 %v65
    %138 = vmatmul.f32.gmra.mxu0 %v63
    %v139 = vpop.f32.mrf.mxu0
    %v140 = vadd.f32 %v99, %v139
    %141 = vdwg.mxu0
    %142 = vst [vmem:[#allocation3] sm:$0xff] %v120
    %143 = vst [vmem:[#allocation3 + $0x8] sm:$0xff] %v140
    // Predicated region
    $region22: #{m_forward.1} parent=1 // pred_check
      _
    $region23: #{m_forward.1} parent=1 // pred_check_branch
      %145 = sbr.rel (0) target = $region25
    $region24: #{m_forward.1} parent=1 // pred_region
      %147 = vsyncadd [#allocation4], 0
      %s149 = sshll.u32 [#allocation3], 4
      %s150 = int_to_ptr.vmem [resolvable:$true] %s149
      %s151 = sshll.u32 %s5, 4
      %s152 = int_to_ptr.hbm [resolvable:$true] %s151
      %154 = dma.vmem_to_hbm [thread:$0]  %s150, 256, %s152, [#allocation4]
    $region25: #{m_forward.1} parent=1 // pred_fallthru
      _
    // Predicated region
    $region26: #{m_forward.1} parent=1 // pred_check
      _
    $region27: #{m_forward.1} parent=1 // pred_check_branch
      %156 = sbr.rel (0) target = $region29
    $region28: #{m_forward.1} parent=1 // pred_region
      %158 = dma.done [#allocation4], 256
    $region29: #{m_forward.1} parent=1 // pred_fallthru
      _
    %159 = vsyncpa [#allocation4], 1

</llo_original>
